<compile_context>
chip_gen: v7x
topology: tpu7x:2x2x1
jax: 0.10.0
libtpu: 0.0.40
codegen_flags: <defaults>
</compile_context>

<pallas_src>
import functools

import jax
import jax.numpy as jnp
from jax import lax
from jax.experimental import pallas as pl
from jax.experimental.pallas import tpu as pltpu

KH = KW = 3  # kernel_size=3, padding=1 ("same")


def _largest_lane_block(total, cap):
    """Largest multiple of 128 that divides `total` (capped), else the full dim."""
    if total % 128 != 0:
        return total
    best, b, limit = 128, 128, min(total, cap)
    while b <= limit:
        if total % b == 0:
            best = b
        b += 128
    return best


# ---------------------------------------------------------------------------
# Kernel 1: 3x3 "same" conv as a single MXU matmul per block:
#   out[n, :, hw_tile] = W_mat(Cout, 9*Cin) @ patches[n](9*Cin, hw_tile)
# ---------------------------------------------------------------------------
def _conv_kernel(p_ref, w_ref, o_ref):
    # p_ref: (1, 9*Cin, hw_blk)   w_ref: (Cout, 9*Cin)   o_ref: (1, Cout, hw_blk)
    o_ref[...] = jnp.dot(
        w_ref[...], p_ref[0], preferred_element_type=jnp.float32
    )[None].astype(o_ref.dtype)


# ---------------------------------------------------------------------------
# Kernel 2: fused affine BatchNorm + ReLU, lane-dense over (N*Cout, H*W).
# ---------------------------------------------------------------------------
def _bn_relu_kernel(y_ref, scale_ref, shift_ref, o_ref):
    o_ref[...] = jnp.maximum(y_ref[...] * scale_ref[...] + shift_ref[...], 0.0)


@functools.partial(jax.jit, static_argnames=("eps",))
def conv_bn_relu(x_nchw, w_oihw, bias, gamma, beta, eps=1e-5):
    del bias  # cancels exactly under training-mode BatchNorm (y - batch_mean)
    N, Cin, H, W = x_nchw.shape
    Cout = w_oihw.shape[0]
    HW = H * W
    K9 = KH * KW * Cin

    x = x_nchw.astype(jnp.float32)
    w = w_oihw.astype(jnp.float32)

    # --- wrapper-side im2col (layout plumbing; tiny at these channel counts) ---
    xpad = jnp.pad(x, ((0, 0), (0, 0), (1, 1), (1, 1)))
    taps = [xpad[:, :, kh:kh + H, kw:kw + W] for kh in range(KH) for kw in range(KW)]
    patches = jnp.stack(taps, axis=1).reshape(N, K9, HW)      # (N, 9*Cin, H*W)
    # OIHW -> (Cout, KH, KW, Cin) -> (Cout, 9*Cin); column = (kh*KW+kw)*Cin + cin
    w_mat = jnp.transpose(w, (0, 2, 3, 1)).reshape(Cout, K9)

    hw_blk = _largest_lane_block(HW, cap=4096)

    conv_out = pl.pallas_call(
        _conv_kernel,
        out_shape=jax.ShapeDtypeStruct((N, Cout, HW), jnp.float32),
        grid_spec=pltpu.PrefetchScalarGridSpec(
            num_scalar_prefetch=0,
            grid=(N, HW // hw_blk),
            in_specs=[
                pl.BlockSpec((1, K9, hw_blk), lambda n, h: (n, 0, h)),
                pl.BlockSpec((Cout, K9), lambda n, h: (0, 0)),
            ],
            out_specs=pl.BlockSpec((1, Cout, hw_blk), lambda n, h: (n, 0, h)),
        ),
        compiler_params=pltpu.CompilerParams(
            dimension_semantics=("parallel", "parallel")),
    )(patches, w_mat)

    # --- BatchNorm2d training-mode batch stats (two-pass, numerically safe) ---
    mean = jnp.mean(conv_out, axis=(0, 2))                               # (Cout,)
    var = jnp.mean(jnp.square(conv_out - mean[None, :, None]), axis=(0, 2))
    scale = gamma.astype(jnp.float32) * lax.rsqrt(var + eps)             # (Cout,)
    shift = beta.astype(jnp.float32) - mean * scale

    NC = N * Cout
    conv_flat = conv_out.reshape(NC, HW)            # row = n*Cout + c (contiguous view)
    scale_rows = jnp.tile(scale, N).reshape(NC, 1)
    shift_rows = jnp.tile(shift, N).reshape(NC, 1)

    lane_blk = _largest_lane_block(HW, cap=8192)

    y = pl.pallas_call(
        _bn_relu_kernel,
        out_shape=jax.ShapeDtypeStruct((NC, HW), jnp.float32),
        grid_spec=pltpu.PrefetchScalarGridSpec(
            num_scalar_prefetch=0,
            grid=(HW // lane_blk,),
            in_specs=[
                pl.BlockSpec((NC, lane_blk), lambda h: (0, h)),
                pl.BlockSpec((NC, 1), lambda h: (0, 0)),
                pl.BlockSpec((NC, 1), lambda h: (0, 0)),
            ],
            out_specs=pl.BlockSpec((NC, lane_blk), lambda h: (0, h)),
        ),
        compiler_params=pltpu.CompilerParams(
            dimension_semantics=("parallel",)),
    )(conv_flat, scale_rows, shift_rows)

    return y.reshape(N, Cout, H, W)                  # already NCHW, no transpose


def _reference(x_nchw, w_oihw, bias, gamma, beta, eps=1e-5):
    conv = lax.conv_general_dilated(
        x_nchw.astype(jnp.float32), w_oihw.astype(jnp.float32),
        window_strides=(1, 1), padding=((1, 1), (1, 1)),
        dimension_numbers=("NCHW", "OIHW", "NCHW"))
    conv = conv + bias[None, :, None, None]
    mean = conv.mean(axis=(0, 2, 3), keepdims=True)
    var = jnp.square(conv - mean).mean(axis=(0, 2, 3), keepdims=True)
    out = (conv - mean) * lax.rsqrt(var + eps) * gamma[None, :, None, None] \
        + beta[None, :, None, None]
    return jnp.maximum(out, 0.0)


if __name__ == "__main__":
    N, Cin, Cout, H, W = 2, 4, 8, 16, 16

    key = jax.random.PRNGKey(0)
    kx, kw, kb, kg, kbeta = jax.random.split(key, 5)
    x = jax.random.normal(kx, (N, Cin, H, W), jnp.float32)
    # Conv2d(in_c=4, out_c=8, kernel_size=3, padding=1) parameter shapes
    w = jax.random.normal(kw, (Cout, Cin, KH, KW), jnp.float32) * 0.1
    b = jax.random.normal(kb, (Cout,), jnp.float32) * 0.1
    # BatchNorm2d(out_c) affine params
    gamma = 1.0 + 0.1 * jax.random.normal(kg, (Cout,), jnp.float32)
    beta = 0.1 * jax.random.normal(kbeta, (Cout,), jnp.float32)

    out = conv_bn_relu(x, w, b, gamma, beta)
    out = jax.block_until_ready(out)

    ref = _reference(x, w, b, gamma, beta)
    assert out.shape == (N, Cout, H, W)
    assert jnp.allclose(out, ref, atol=1e-2, rtol=1e-2), \
        f"max err {jnp.max(jnp.abs(out - ref))}"

    print("KERNEL_OK")
</pallas_src>

<mosaic_0001>
module attributes {stable_mosaic.version = 11 : i64} {
  func.func @_conv_kernel(%arg0: i32, %arg1: i32, %arg2: memref<1x36x256xf32, #tpu.memory_space<vmem>>, %arg3: memref<8x36xf32, #tpu.memory_space<vmem>>, %arg4: memref<1x8x256xf32, #tpu.memory_space<vmem>>) attributes {dimension_semantics = [#tpu.dimension_semantics<parallel>, #tpu.dimension_semantics<parallel>], iteration_bounds = array<i64: 2, 1>, scalar_prefetch = 0 : i64, scratch_operands = 0 : i64, tpu.core_type = #tpu.core_type<tc>, window_params = [{transform_indices = @transform_0, window_bounds = array<i64: 1, 36, 256>}, {pipeline_mode = #tpu.pipeline_mode<synchronous>, transform_indices = @transform_1, window_bounds = array<i64: 8, 36>}, {transform_indices = @transform_2, window_bounds = array<i64: 1, 8, 256>}]} {
    %c0 = arith.constant 0 : index
    %c0_0 = arith.constant 0 : index
    %0 = vector.load %arg3[%c0, %c0_0] : memref<8x36xf32, #tpu.memory_space<vmem>>, vector<8x36xf32>
    %c0_1 = arith.constant 0 : index
    %c0_2 = arith.constant 0 : index
    %c0_3 = arith.constant 0 : index
    %1 = vector.load %arg2[%c0_1, %c0_2, %c0_3] : memref<1x36x256xf32, #tpu.memory_space<vmem>>, vector<1x36x256xf32>
    %2 = vector.shape_cast %1 : vector<1x36x256xf32> to vector<36x256xf32>
    %cst = arith.constant dense<0.000000e+00> : vector<8x256xf32>
    %3 = tpu.matmul %0, %2, %cst {dimension_numbers = #tpu.dot_dimension_numbers<[1], [0], [0], [1], [0, 0, 1, 1], [], []>} : vector<8x36xf32>, vector<36x256xf32>, vector<8x256xf32> -> vector<8x256xf32>
    %4 = vector.shape_cast %3 : vector<8x256xf32> to vector<1x8x256xf32>
    %c0_4 = arith.constant 0 : index
    %c0_5 = arith.constant 0 : index
    %c0_6 = arith.constant 0 : index
    %5 = vector.load %arg4[%c0_4, %c0_5, %c0_6] : memref<1x8x256xf32, #tpu.memory_space<vmem>>, vector<1x8x256xf32>
    tpu.vector_store %arg4[%c0_4, %c0_5, %c0_6], %4 {strides = array<i32>} : memref<1x8x256xf32, #tpu.memory_space<vmem>>, vector<1x8x256xf32>,
    return
  }
  func.func @transform_0(%arg0: i32, %arg1: i32) -> (i32, i32, i32) {
    %c0_i32 = arith.constant 0 : i32
    %c0_i32_0 = arith.constant 0 : i32
    return %arg0, %c0_i32, %arg1 : i32, i32, i32
  }
  func.func @transform_1(%arg0: i32, %arg1: i32) -> (i32, i32) {
    %c0_i32 = arith.constant 0 : i32
    %c0_i32_0 = arith.constant 0 : i32
    %c0_i32_1 = arith.constant 0 : i32
    return %c0_i32, %c0_i32_0 : i32, i32
  }
  func.func @transform_2(%arg0: i32, %arg1: i32) -> (i32, i32, i32) {
    %c0_i32 = arith.constant 0 : i32
    %c0_i32_0 = arith.constant 0 : i32
    return %arg0, %c0_i32, %arg1 : i32, i32, i32
  }
}

module attributes {stable_mosaic.version = 11 : i64} {
  func.func @_bn_relu_kernel(%arg0: i32, %arg1: memref<16x256xf32, #tpu.memory_space<vmem>>, %arg2: memref<16x1xf32, #tpu.memory_space<vmem>>, %arg3: memref<16x1xf32, #tpu.memory_space<vmem>>, %arg4: memref<16x256xf32, #tpu.memory_space<vmem>>) attributes {dimension_semantics = [#tpu.dimension_semantics<parallel>], iteration_bounds = array<i64: 1>, scalar_prefetch = 0 : i64, scratch_operands = 0 : i64, tpu.core_type = #tpu.core_type<tc>, window_params = [{transform_indices = @transform_0, window_bounds = array<i64: 16, 256>}, {pipeline_mode = #tpu.pipeline_mode<synchronous>, transform_indices = @transform_1, window_bounds = array<i64: 16, 1>}, {pipeline_mode = #tpu.pipeline_mode<synchronous>, transform_indices = @transform_2, window_bounds = array<i64: 16, 1>}, {transform_indices = @transform_3, window_bounds = array<i64: 16, 256>}]} {
    %c0 = arith.constant 0 : index
    %c0_0 = arith.constant 0 : index
    %0 = vector.load %arg1[%c0, %c0_0] : memref<16x256xf32, #tpu.memory_space<vmem>>, vector<16x256xf32>
    %c0_1 = arith.constant 0 : index
    %c0_2 = arith.constant 0 : index
    %1 = vector.load %arg2[%c0_1, %c0_2] : memref<16x1xf32, #tpu.memory_space<vmem>>, vector<16x1xf32>
    %2 = vector.broadcast %1 : vector<16x1xf32> to vector<16x256xf32>
    %3 = arith.mulf %0, %2 : vector<16x256xf32>
    %c0_3 = arith.constant 0 : index
    %c0_4 = arith.constant 0 : index
    %4 = vector.load %arg3[%c0_3, %c0_4] : memref<16x1xf32, #tpu.memory_space<vmem>>, vector<16x1xf32>
    %5 = vector.broadcast %4 : vector<16x1xf32> to vector<16x256xf32>
    %6 = arith.addf %3, %5 : vector<16x256xf32>
    %cst = arith.constant 0.000000e+00 : f32
    %7 = vector.broadcast %cst : f32 to vector<16x256xf32>
    %8 = arith.maximumf %6, %7 : vector<16x256xf32>
    %c0_5 = arith.constant 0 : index
    %c0_6 = arith.constant 0 : index
    %9 = vector.load %arg4[%c0_5, %c0_6] : memref<16x256xf32, #tpu.memory_space<vmem>>, vector<16x256xf32>
    tpu.vector_store %arg4[%c0_5, %c0_6], %8 {strides = array<i32>} : memref<16x256xf32, #tpu.memory_space<vmem>>, vector<16x256xf32>,
    return
  }
  func.func @transform_0(%arg0: i32) -> (i32, i32) {
    %c0_i32 = arith.constant 0 : i32
    %c0_i32_0 = arith.constant 0 : i32
    return %c0_i32, %arg0 : i32, i32
  }
  func.func @transform_1(%arg0: i32) -> (i32, i32) {
    %c0_i32 = arith.constant 0 : i32
    %c0_i32_0 = arith.constant 0 : i32
    %c0_i32_1 = arith.constant 0 : i32
    return %c0_i32, %c0_i32_0 : i32, i32
  }
  func.func @transform_2(%arg0: i32) -> (i32, i32) {
    %c0_i32 = arith.constant 0 : i32
    %c0_i32_0 = arith.constant 0 : i32
    %c0_i32_1 = arith.constant 0 : i32
    return %c0_i32, %c0_i32_0 : i32, i32
  }
  func.func @transform_3(%arg0: i32) -> (i32, i32) {
    %c0_i32 = arith.constant 0 : i32
    %c0_i32_0 = arith.constant 0 : i32
    return %c0_i32, %arg0 : i32, i32
  }
}

</mosaic_0001>

<llo_original>
// kernel: tile.13
$region0: #{tile.13}
  #allocation0 [shape = 's32[1]{0}', space=sflag, size = 0x4, scoped, tag = 'scoped memory for tile.13']
  %s0 = inlined_call_operand.vmem [shape: f32[8], index: 0, kind: input, shape index: {}]
  %s1 = inlined_call_operand.vmem [shape: f32[2,8], index: 1, kind: output, shape index: {}]
  // Predicated region
  $region2: #{tile.13} parent=0 // pred_check
    _
  $region3: #{tile.13} parent=0 // pred_check_branch
    %3 = sbr.rel (0) target = $region5
  $region4: #{tile.13} parent=0 // pred_region
    _
  $region5: #{tile.13} parent=0 // pred_fallthru
    _
  %v4 = vld [vmem:[%s0] ss:$0 sm:$0xff]
  %5 = vst [vmem:[%s1] sm:$0x3] %v4

// kernel: tile.0
$region0: #{tile.0}
  %s0 = inlined_call_operand.vmem [shape: f32[2,8], index: 0, kind: input, shape index: {}]
  %s1 = inlined_call_operand.vmem [shape: f32[16,1], index: 1, kind: output, shape index: {}]
  $region1: #{tile.0} parent=0
    #allocation0 [shape = 'u8[4096]{0}', space=vmem, size = 0x1000, scoped, tag = 'scoped mem for input reshape']
    %s3 = sshllo.u32 0, 2
    %v4 = vld [vmem:[%s0] sm:%s3]
    %5 = vst [vmem:[#allocation0] sm:%s3] %v4
    %v6 = vld [vmem:[#allocation0] sm:$0x3]
    %vm7 = vcmask 7168
    %8 = vst.msk [vmem:[%s1] ss:$8 sm:$0x3] %vm7, %v6
    %v9 = vld [vmem:[#allocation0] sm:$0x3]
    %10 = vrot.lane.b32.xlu0 %v9, 127
    %v11 = vpop.permute.xlu0 %10
    %vm12 = vcmask 7168
    %s13 = scalar_lea.vmem %s1, 1
    %14 = vst.msk [vmem:[%s13] ss:$8 sm:$0x3] %vm12, %v11
    %v15 = vld [vmem:[#allocation0] sm:$0x3]
    %16 = vrot.lane.b32.xlu0 %v15, 126
    %v17 = vpop.permute.xlu0 %16
    %vm18 = vcmask 7168
    %s19 = scalar_lea.vmem %s1, 2
    %20 = vst.msk [vmem:[%s19] ss:$8 sm:$0x3] %vm18, %v17
    %v21 = vld [vmem:[#allocation0] sm:$0x3]
    %22 = vrot.lane.b32.xlu0 %v21, 125
    %v23 = vpop.permute.xlu0 %22
    %vm24 = vcmask 7168
    %s25 = scalar_lea.vmem %s1, 3
    %26 = vst.msk [vmem:[%s25] ss:$8 sm:$0x3] %vm24, %v23
    %v27 = vld [vmem:[#allocation0] sm:$0x3]
    %28 = vrot.lane.b32.xlu0 %v27, 124
    %v29 = vpop.permute.xlu0 %28
    %vm30 = vcmask 7168
    %s31 = scalar_lea.vmem %s1, 4
    %32 = vst.msk [vmem:[%s31] ss:$8 sm:$0x3] %vm30, %v29
    %v33 = vld [vmem:[#allocation0] sm:$0x3]
    %34 = vrot.lane.b32.xlu0 %v33, 123
    %v35 = vpop.permute.xlu0 %34
    %vm36 = vcmask 7168
    %s37 = scalar_lea.vmem %s1, 5
    %38 = vst.msk [vmem:[%s37] ss:$8 sm:$0x3] %vm36, %v35
    %v39 = vld [vmem:[#allocation0] sm:$0x3]
    %40 = vrot.lane.b32.xlu0 %v39, 122
    %v41 = vpop.permute.xlu0 %40
    %vm42 = vcmask 7168
    %s43 = scalar_lea.vmem %s1, 6
    %44 = vst.msk [vmem:[%s43] ss:$8 sm:$0x3] %vm42, %v41
    %v45 = vld [vmem:[#allocation0] sm:$0x3]
    %46 = vrot.lane.b32.xlu0 %v45, 121
    %v47 = vpop.permute.xlu0 %46
    %vm48 = vcmask 7168
    %s49 = scalar_lea.vmem %s1, 7
    %50 = vst.msk [vmem:[%s49] ss:$8 sm:$0x3] %vm48, %v47

// kernel: conv_bn_relu.2
$region0: #{conv_bn_relu.2}
  #allocation0 [shape = 'u32[]', space=smem, size = 0x4, offset = 0x4, fixed_abs, tag = 'smem constant byte address 0x4 - core index']
  #allocation1 [shape = 'u32[144,128]{1,0:T(1,128)}', space=vmem, size = 0x12000, scoped, tag = 'internal scratch']
  %s0 = inlined_call_operand.vmem [shape: f32[2,36,256], index: 0, kind: input, shape index: {}]
  %s1 = inlined_call_operand.vmem [shape: f32[8,36], index: 1, kind: input, shape index: {}]
  %s2 = inlined_call_operand.vmem [shape: f32[2,8,256], index: 2, kind: output, shape index: {}]
  %s3 = sld [smem:[#allocation0]]
  $region41: #{conv_bn_relu.2} parent=0
    _
  %s5 = ssub.s32 1, %s3
  %s6 = scalar_select 0, %s5, %s3
  loop: start=0, step=1, limit=4
  $region2: #{conv_bn_relu.2} parent=0 // loop_pre_header
    _
  $region3: #{conv_bn_relu.2} parent=0 // loop_header
    %s8 = sphi 0, %s12
    %p9 = scmp.ge.s32.totalorder %s8, 4
    %s15 = sphi 0, %s27
    %s16 = sphi 0, %s23
    %s17 = sphi 0, %s15
    %s18 = sphi 0, %s16
    %s19 = sphi 0, %s17
    %s20 = sphi 0, %s18
    %s32 = sphi 0, %s34
    %s35 = sphi 0, %s32
    %s36 = sphi 0, %s35
    %s52 = sphi 0, %s36
    %s56 = sphi 0, %s56
    %s58 = sphi 0, %s56
    %s59 = sphi 0, %s58
    %s73 = sphi 0, %s59
    %s81 = sphi 0, %s83
    %s84 = sphi 0, %s81
    %s85 = sphi 0, %s84
    %s101 = sphi 0, %s85
  $region4: #{conv_bn_relu.2} parent=0 // loop_header_branch
    %11 = sbr.rel (%p9) target = $region8
  $region5: #{conv_bn_relu.2} parent=0 // loop_body
    %s13 = ssub.s32 %s8, 1
    %s14 = ssub.s32 %s8, 2
    %s21 = sadd.s32 1, %s16
    %p22 = scmp.ge.s32.totalorder %s21, 1
    %s23 = scalar_select %p22, 0, %s21
    %s24 = sadd.s32 1, %s15
    %s25 = scalar_select %p22, %s24, %s15
    %p26 = scmp.ge.s32.totalorder %s25, 2
    %s27 = scalar_select %p26, 0, %s25
    %s28 = ssub.s32 %s15, %s27
    %s29 = ssub.s32 %s16, %s23
    %s30 = sor.u32 %s28, %s29
    %p31 = scmp.eq.s32.totalorder %s30, 0
    %s33 = sadd.s32 %s32, 1
    %s34 = scalar_select %p31, %s32, %s33
    %p37 = pneg %p31
    %p38 = scmp.eq.s32.totalorder %s8, 1
    %p39 = por %p37, %p38
    %p40 = scmp.ne.s32.totalorder %s32, %s35
    %p41 = scmp.eq.s32.totalorder %s8, 0
    %p42 = por %p40, %p41
    %p43 = scmp.ne.s32.totalorder %s32, %s35
    %p44 = scmp.eq.s32.totalorder %s13, 1
    %p45 = por %p43, %p44
    %p46 = scmp.ne.s32.totalorder %s35, %s36
    %p47 = scmp.eq.s32.totalorder %s13, 0
    %p48 = por %p46, %p47
    %p49 = scmp.ne.s32.totalorder %s35, %s36
    %p50 = scmp.eq.s32.totalorder %s14, 1
    %p51 = por %p49, %p50
    %p53 = scmp.ne.s32.totalorder %s36, %s52
    %p54 = scmp.eq.s32.totalorder %s14, 0
    %p55 = por %p53, %p54
    %s57 = sadd.s32 %s56, 1
    %p60 = scmp.eq.s32.totalorder %s8, 1
    %p61 = scmp.ne.s32.totalorder %s56, %s58
    %p62 = scmp.eq.s32.totalorder %s8, 0
    %p63 = por %p61, %p62
    %p64 = scmp.ne.s32.totalorder %s56, %s58
    %p65 = scmp.eq.s32.totalorder %s13, 1
    %p66 = por %p64, %p65
    %p67 = scmp.ne.s32.totalorder %s58, %s59
    %p68 = scmp.eq.s32.totalorder %s13, 0
    %p69 = por %p67, %p68
    %p70 = scmp.ne.s32.totalorder %s58, %s59
    %p71 = scmp.eq.s32.totalorder %s14, 1
    %p72 = por %p70, %p71
    %p74 = scmp.ne.s32.totalorder %s59, %s73
    %p75 = scmp.eq.s32.totalorder %s14, 0
    %p76 = por %p74, %p75
    %s77 = ssub.s32 %s15, %s27
    %s78 = ssub.s32 %s16, %s23
    %s79 = sor.u32 %s77, %s78
    %p80 = scmp.eq.s32.totalorder %s79, 0
    %s82 = sadd.s32 %s81, 1
    %s83 = scalar_select %p80, %s81, %s82
    %p86 = pneg %p80
    %p87 = scmp.eq.s32.totalorder %s8, 1
    %p88 = por %p86, %p87
    %p89 = scmp.ne.s32.totalorder %s81, %s84
    %p90 = scmp.eq.s32.totalorder %s8, 0
    %p91 = por %p89, %p90
    %p92 = scmp.ne.s32.totalorder %s81, %s84
    %p93 = scmp.eq.s32.totalorder %s13, 1
    %p94 = por %p92, %p93
    %p95 = scmp.ne.s32.totalorder %s84, %s85
    %p96 = scmp.eq.s32.totalorder %s13, 0
    %p97 = por %p95, %p96
    %p98 = scmp.ne.s32.totalorder %s84, %s85
    %p99 = scmp.eq.s32.totalorder %s14, 1
    %p100 = por %p98, %p99
    %p102 = scmp.ne.s32.totalorder %s85, %s101
    %p103 = scmp.eq.s32.totalorder %s14, 0
    %p104 = por %p102, %p103
    %p105 = scmp.le.s32.totalorder 1, %s8
    %p106 = scmp.lt.s32.totalorder %s8, 3
    %p107 = pnand %p105, %p106
    %p108 = pneg %p107
    // Predicated region
    $region9: #{conv_bn_relu.2} parent=5 // pred_check
      _
    $region10: #{conv_bn_relu.2} parent=5 // pred_check_branch
      %110 = sbr.rel (%p107) target = $region12
    $region11: #{conv_bn_relu.2} parent=5 // pred_region
      %s111 = ssub.s32 %s8, 1
      // Predicated region
      $region13: #{conv_bn_relu.2} parent=11 // pred_check
        %p112 = pneg %p69
      $region14: #{conv_bn_relu.2} parent=11 // pred_check_branch
        %114 = sbr.rel (%p112) target = $region16
      $region15: #{conv_bn_relu.2} parent=11 // pred_region
        _
      $region16: #{conv_bn_relu.2} parent=11 // pred_fallthru
        _
    $region12: #{conv_bn_relu.2} parent=5 // pred_fallthru
      _
    %p115 = scmp.lt.s32.totalorder %s8, 2
    // Predicated region
    $region17: #{conv_bn_relu.2} parent=5 // pred_check
      %p116 = pneg %p115
    $region18: #{conv_bn_relu.2} parent=5 // pred_check_branch
      %118 = sbr.rel (%p116) target = $region20
    $region19: #{conv_bn_relu.2} parent=5 // pred_region
      // Predicated region
      $region21: #{conv_bn_relu.2} parent=19 // pred_check
        %p119 = pneg %p42
      $region22: #{conv_bn_relu.2} parent=19 // pred_check_branch
        %121 = sbr.rel (%p119) target = $region24
      $region23: #{conv_bn_relu.2} parent=19 // pred_region
        %s122 = smul.u32 2, %s16
        %p123 = scmp.lt.s32.totalorder %s15, 1
        %s124 = scalar_select %p123, %s15, 1
        %p125 = scmp.lt.s32.totalorder %s122, 1
        %s126 = scalar_select %p125, %s122, 1
        %s127 = smul.addr %s124, 10
        %s128 = sadd.s32 %s126, %s127
        %s129 = smul.addr %s128, 8
        %s130 = scalar_lea.vmem %s0, %s129
        %s131 = smul.u32 2, %s16
      $region24: #{conv_bn_relu.2} parent=19 // pred_fallthru
        _
    $region20: #{conv_bn_relu.2} parent=5 // pred_fallthru
      _
    %p132 = scmp.le.s32.totalorder 1, %s8
    %p133 = scmp.lt.s32.totalorder %s8, 3
    %p134 = pnand %p132, %p133
    %p135 = pneg %p134
    // Predicated region
    $region25: #{conv_bn_relu.2} parent=5 // pred_check
      _
    $region26: #{conv_bn_relu.2} parent=5 // pred_check_branch
      %137 = sbr.rel (%p134) target = $region28
    $region27: #{conv_bn_relu.2} parent=5 // pred_region
      %s138 = ssub.s32 %s8, 1
      %s139 = smul.u32 2, %s18
      %p140 = scmp.lt.s32.totalorder %s17, 1
      %s141 = scalar_select %p140, %s17, 1
      %p142 = scmp.lt.s32.totalorder %s139, 1
      %s143 = scalar_select %p142, %s139, 1
      %s144 = smul.addr %s141, 10
      %s145 = sadd.s32 %s143, %s144
      %s146 = smul.addr %s145, 8
      %s147 = scalar_lea.vmem %s0, %s146
      %p148 = pneg %p48
      %p149 = pneg %p45
      %p150 = pneg %p69
      %p151 = pneg %p66
      %p152 = pneg %p97
      %p153 = pneg %p94
      %s154 = smul.u32 2, %s18
      %p155 = scmp.lt.s32.totalorder %s17, 1
      %s156 = scalar_select %p155, %s17, 1
      %p157 = scmp.lt.s32.totalorder %s154, 1
      %s158 = scalar_select %p157, %s154, 1
      %s159 = smul.addr %s156, 2
      %s160 = sadd.s32 %s158, %s159
      %s161 = smul.addr %s160, 8
      %s162 = scalar_lea.vmem %s2, %s161
      %s163 = smul.u32 2, %s18
      %p164 = scmp.lt.s32.totalorder %s17, 1
      %s165 = scalar_select %p164, %s17, 1
      %p166 = scmp.lt.s32.totalorder %s163, 1
      %s167 = scalar_select %p166, %s163, 1
      %s168 = smul.addr %s165, 10
      %s169 = sadd.s32 %s167, %s168
      %s170 = smul.addr %s169, 8
      %s171 = scalar_lea.vmem %s0, %s170
      %s172 = smul.u32 2, %s18
      %s173 = smul.u32 2, %s18
      %p174 = scmp.lt.s32.totalorder %s17, 1
      %s175 = scalar_select %p174, %s17, 1
      %p176 = scmp.lt.s32.totalorder %s173, 1
      %s177 = scalar_select %p176, %s173, 1
      %s178 = smul.addr %s175, 2
      %s179 = sadd.s32 %s177, %s178
      %s180 = smul.addr %s179, 8
      %s181 = scalar_lea.vmem %s2, %s180
      %s182 = smul.u32 2, %s18
      %v183 = vld [vmem:[%s1] sm:$0xff]
      %v184 = vld [vmem:[%s171] sm:$0xff]
      %v185 = vld [vmem:[%s171 + $0x8] sm:$0xff]
      %v186 = vld [vmem:[%s171 + $0x10] sm:$0xff]
      %v187 = vld [vmem:[%s171 + $0x18] sm:$0xff]
      %v188 = vld [vmem:[%s171 + $0x20] sm:$0xff]
      %v189 = vld [vmem:[%s171 + $0x28] sm:$0xff]
      %v190 = vld [vmem:[%s171 + $0x30] sm:$0xff]
      %v191 = vld [vmem:[%s171 + $0x38] sm:$0xff]
      %v192 = vld [vmem:[%s171 + $0x40] sm:$0xf]
      %v193 = vld [vmem:[%s171 + $0x48] sm:$0xf]
      %vm194 = vcmask 293888
      %v196 = vsel %vm194, %v183, 0
      %vm198 = vcmask 1043456
      %v200 = vsel %vm198, %v192, 0
      %v203 = vsel %vm198, %v193, 0
      %205 = vmatprep.subr.mxu0 %v185
      %206 = vmatpush1.msra.mxu0 %v184
      %207 = vmatprep.subr.mxu0 %v187
      %208 = vmatpush1.msra.mxu0 %v186
      %209 = vmatprep.subr.mxu0 %v189
      %210 = vmatpush1.msra.mxu0 %v188
      %211 = vmatprep.subr.mxu0 %v191
      %212 = vmatpush1.msra.mxu0 %v190
      %213 = vmatprep.subr.mxu0 %v203
      %214 = vmatpush1.msra.mxu0 %v200
      %215 = vmatprep.subr.mxu0 0.0
      %216 = vmatpush1.msra.mxu0 0.0
      %217 = vmatprep.subr.mxu0 0.0
      %218 = vmatpush1.msra.mxu0 0.0
      %219 = vmatprep.subr.mxu0 0.0
      %220 = vmatpush1.msra.mxu0 0.0
      %221 = vmatprep.subr.mxu0 0.0
      %222 = vmatpush1.msra.mxu0 0.0
      %223 = vmatprep.subr.mxu0 0.0
      %224 = vmatpush1.msra.mxu0 0.0
      %225 = vmatprep.subr.mxu0 0.0
      %226 = vmatpush1.msra.mxu0 0.0
      %227 = vmatprep.subr.mxu0 0.0
      %228 = vmatpush1.msra.mxu0 0.0
      %229 = vmatprep.subr.mxu0 0.0
      %230 = vmatpush1.msra.mxu0 0.0
      %231 = vmatprep.subr.mxu0 0.0
      %232 = vmatpush1.msra.mxu0 0.0
      %233 = vmatprep.subr.mxu0 0.0
      %234 = vmatpush1.msra.mxu0 0.0
      %235 = vmatprep.subr.mxu0 0.0
      %236 = vmatpush1.msra.mxu0 0.0
      %237 = vmatprep.subr.mxu0 0.0
      %238 = vmatpush1.msra.mxu0 0.0
      %239 = vmatprep.subr.mxu0 0.0
      %240 = vmatpush1.msra.mxu0 0.0
      %241 = vmatprep.subr.mxu0 0.0
      %242 = vmatpush1.msra.mxu0 0.0
      %243 = vmatprep.subr.mxu0 0.0
      %244 = vmatpush1.msra.mxu0 0.0
      %245 = vmatprep.subr.mxu0 0.0
      %246 = vmatpush1.msra.mxu0 0.0
      %247 = vmatprep.subr.mxu0 0.0
      %248 = vmatpush1.msra.mxu0 0.0
      %249 = vmatprep.subr.mxu0 0.0
      %250 = vmatpush1.msra.mxu0 0.0
      %251 = vmatprep.subr.mxu0 0.0
      %252 = vmatpush1.msra.mxu0 0.0
      %253 = vmatprep.subr.mxu0 0.0
      %254 = vmatpush1.msra.mxu0 0.0
      %255 = vmatprep.subr.mxu0 0.0
      %256 = vmatpush1.msra.mxu0 0.0
      %257 = vmatprep.subr.mxu0 0.0
      %258 = vmatpush1.msra.mxu0 0.0
      %259 = vmatprep.subr.mxu0 0.0
      %260 = vmatpush1.msra.mxu0 0.0
      %261 = vmatprep.subr.mxu0 0.0
      %262 = vmatpush1.msra.mxu0 0.0
      %263 = vmatprep.subr.mxu0 0.0
      %264 = vmatpush1.msra.mxu0 0.0
      %265 = vmatprep.subr.mxu0 0.0
      %266 = vmatpush1.msra.mxu0 0.0
      %267 = vmatprep.subr.mxu0 0.0
      %268 = vmatpush1.msra.mxu0 0.0
      %269 = vmatprep.mubr.f32.mxu0 0.0
      %270 = vmatmul.mubr.f32.gmra.mrb[0].mxu0 %v196
      %v271 = vpop.f32.mrb[0].mxu0
      %v272 = vadd.f32 0.0, %v271
      %v273 = vpop.f32.mrb[0].mxu0
      %v274 = vadd.f32 0.0, %v273
      %275 = vdwg.mxu0
      %276 = vst [vmem:[%s181] sm:$0xff] %v272
      %277 = vst [vmem:[%s181 + $0x8] sm:$0xff] %v274
      %s278 = smul.u32 2, %s18
      %p279 = scmp.lt.s32.totalorder %s17, 1
      %s280 = scalar_select %p279, %s17, 1
      %p281 = scmp.lt.s32.totalorder %s278, 1
      %s282 = scalar_select %p281, %s278, 1
      %s283 = smul.addr %s280, 2
      %s284 = sadd.s32 %s282, %s283
      %s285 = smul.addr %s284, 8
      %s286 = scalar_lea.vmem %s2, %s285
      // Predicated region
      $region29: #{conv_bn_relu.2} parent=27 // pred_check
        %p287 = pneg %p94
      $region30: #{conv_bn_relu.2} parent=27 // pred_check_branch
        %289 = sbr.rel (%p287) target = $region32
      $region31: #{conv_bn_relu.2} parent=27 // pred_region
        %s290 = smul.u32 2, %s18
      $region32: #{conv_bn_relu.2} parent=27 // pred_fallthru
        _
    $region28: #{conv_bn_relu.2} parent=5 // pred_fallthru
      _
    %p291 = scmp.le.s32.totalorder 2, %s8
    // Predicated region
    $region33: #{conv_bn_relu.2} parent=5 // pred_check
      %p292 = pneg %p291
    $region34: #{conv_bn_relu.2} parent=5 // pred_check_branch
      %294 = sbr.rel (%p292) target = $region36
    $region35: #{conv_bn_relu.2} parent=5 // pred_region
      %s295 = ssub.s32 %s8, 2
      // Predicated region
      $region37: #{conv_bn_relu.2} parent=35 // pred_check
        %p296 = pneg %p100
      $region38: #{conv_bn_relu.2} parent=35 // pred_check_branch
        %298 = sbr.rel (%p296) target = $region40
      $region39: #{conv_bn_relu.2} parent=35 // pred_region
        %s299 = smul.u32 2, %s20
        %p300 = scmp.lt.s32.totalorder %s19, 1
        %s301 = scalar_select %p300, %s19, 1
        %p302 = scmp.lt.s32.totalorder %s299, 1
        %s303 = scalar_select %p302, %s299, 1
        %s304 = smul.addr %s301, 2
        %s305 = sadd.s32 %s303, %s304
        %s306 = smul.addr %s305, 8
        %s307 = scalar_lea.vmem %s2, %s306
      $region40: #{conv_bn_relu.2} parent=35 // pred_fallthru
        _
    $region36: #{conv_bn_relu.2} parent=5 // pred_fallthru
      _
  $region6: #{conv_bn_relu.2} parent=0 // loop_footer
    %s12 = sadd.s32 1, %s8
  $region7: #{conv_bn_relu.2} parent=0 // loop_footer_branch
    %7 = sbr.rel target = $region3
  $region8: #{conv_bn_relu.2} parent=0 // loop_exit
    _

// kernel: conv_bn_relu.3
$region0: #{conv_bn_relu.3}
  #allocation0 [shape = 'u32[]', space=smem, size = 0x4, offset = 0x4, fixed_abs, tag = 'smem constant byte address 0x4 - core index']
  #allocation1 [shape = 'u32[144,128]{1,0:T(1,128)}', space=vmem, size = 0x12000, scoped, tag = 'internal scratch']
  %s0 = inlined_call_operand.vmem [shape: f32[16,256], index: 0, kind: input, shape index: {}]
  %s1 = inlined_call_operand.vmem [shape: f32[16,1], index: 1, kind: input, shape index: {}]
  %s2 = inlined_call_operand.vmem [shape: f32[16,1], index: 2, kind: input, shape index: {}]
  %s3 = inlined_call_operand.vmem [shape: f32[16,256], index: 3, kind: output, shape index: {}]
  %s4 = sld [smem:[#allocation0]]
  $region22: #{conv_bn_relu.3} parent=0
    _
  %s6 = ssub.s32 1, %s4
  %s7 = scalar_select 0, %s6, %s4
  // Predicated region
  $region2: #{conv_bn_relu.3} parent=0 // pred_check
    _
  $region3: #{conv_bn_relu.3} parent=0 // pred_check_branch
    %9 = sbr.rel (0) target = $region5
  $region4: #{conv_bn_relu.3} parent=0 // pred_region
    _
  $region5: #{conv_bn_relu.3} parent=0 // pred_fallthru
    _
  // Predicated region
  $region6: #{conv_bn_relu.3} parent=0 // pred_check
    _
  $region7: #{conv_bn_relu.3} parent=0 // pred_check_branch
    %11 = sbr.rel (0) target = $region9
  $region8: #{conv_bn_relu.3} parent=0 // pred_region
    _
  $region9: #{conv_bn_relu.3} parent=0 // pred_fallthru
    _
  // Predicated region
  $region10: #{conv_bn_relu.3} parent=0 // pred_check
    _
  $region11: #{conv_bn_relu.3} parent=0 // pred_check_branch
    %13 = sbr.rel (0) target = $region13
  $region12: #{conv_bn_relu.3} parent=0 // pred_region
    _
  $region13: #{conv_bn_relu.3} parent=0 // pred_fallthru
    _
  %v14 = vld [vmem:[%s0] sm:$0xff]
  %v15 = vld [vmem:[%s0 + $0x8] sm:$0xff]
  %v16 = vld [vmem:[%s0 + $0x10] sm:$0xff]
  %v17 = vld [vmem:[%s0 + $0x18] sm:$0xff]
  %v18 = vld [vmem:[%s1] sm:$0xff]
  %v19 = vld [vmem:[%s1 + $0x8] sm:$0xff]
  %21 = vset.pattern.permute.xlu0 0
  %22 = vperm.xlu0 %21, %v18
  %v23 = vpop.permute.xlu0 %22
  %26 = vset.pattern.permute.xlu0 0
  %27 = vperm.xlu0 %26, %v19
  %v28 = vpop.permute.xlu0 %27
  %v30 = vmul.f32 %v14, %v23
  %v31 = vmul.f32 %v15, %v23
  %v32 = vmul.f32 %v16, %v28
  %v33 = vmul.f32 %v17, %v28
  %v34 = vld [vmem:[%s2] sm:$0xff]
  %v35 = vld [vmem:[%s2 + $0x8] sm:$0xff]
  %37 = vset.pattern.permute.xlu0 0
  %38 = vperm.xlu0 %37, %v34
  %v39 = vpop.permute.xlu0 %38
  %42 = vset.pattern.permute.xlu0 0
  %43 = vperm.xlu0 %42, %v35
  %v44 = vpop.permute.xlu0 %43
  %v46 = vadd.f32 %v30, %v39
  %v47 = vadd.f32 %v31, %v39
  %v48 = vadd.f32 %v32, %v44
  %v49 = vadd.f32 %v33, %v44
  %v50 = vmax.f32 %v46, 0.0
  %v51 = vmax.f32 %v47, 0.0
  %v52 = vmax.f32 %v48, 0.0
  %v53 = vmax.f32 %v49, 0.0
  %54 = vst [vmem:[%s3] sm:$0xff] %v50
  %55 = vst [vmem:[%s3 + $0x8] sm:$0xff] %v51
  %56 = vst [vmem:[%s3 + $0x10] sm:$0xff] %v52
  %57 = vst [vmem:[%s3 + $0x18] sm:$0xff] %v53
  // Predicated region
  $region14: #{conv_bn_relu.3} parent=0 // pred_check
    _
  $region15: #{conv_bn_relu.3} parent=0 // pred_check_branch
    %59 = sbr.rel (0) target = $region17
  $region16: #{conv_bn_relu.3} parent=0 // pred_region
    _
  $region17: #{conv_bn_relu.3} parent=0 // pred_fallthru
    _
  // Predicated region
  $region18: #{conv_bn_relu.3} parent=0 // pred_check
    _
  $region19: #{conv_bn_relu.3} parent=0 // pred_check_branch
    %61 = sbr.rel (0) target = $region21
  $region20: #{conv_bn_relu.3} parent=0 // pred_region
    _
  $region21: #{conv_bn_relu.3} parent=0 // pred_fallthru
    _

</llo_original>
